<compile_context>
chip_gen: v7x
topology: tpu7x:2x2x1
jax: 0.10.0
libtpu: 0.0.40
codegen_flags: <defaults>
</compile_context>

<pallas_src>
import jax
import jax.numpy as jnp
from jax import lax
from jax.experimental import pallas as pl
from jax.experimental.pallas import tpu as pltpu


# ---------------------------------------------------------------------------
# Helpers
# ---------------------------------------------------------------------------
def _largest_divisor(n, limit, multiple=1):
    """Largest d <= limit with n % d == 0 and d % multiple == 0 (fallback: n)."""
    best = 0
    for d in range(1, min(n, limit) + 1):
        if n % d == 0 and d % multiple == 0:
            best = d
    return best if best > 0 else n


_VMEM_SPEC = pl.BlockSpec(memory_space=pltpu.MemorySpace.VMEM)


# ---------------------------------------------------------------------------
# Kernel 1: input projection  G[d] = sum_s A[s] @ W[d, s] + b[d]
# ---------------------------------------------------------------------------
def _proj_kernel(a_ref, w_ref, b_ref, g_ref):
    """One row-chunk, one direction.

    a_ref : (n_src, Rc, F)     feature streams (1 for layer 0, 2 = fw/bw afterwards)
    w_ref : (1, n_src, F, 4H)  input->gates weights of the selected direction
    b_ref : (1, 1, 4H)         b_ih + b_hh of the selected direction (folded once)
    g_ref : (1, Rc, 4H)        precomputed gate inputs
    """
    n_src = a_ref.shape[0]
    acc = jnp.dot(a_ref[0], w_ref[0, 0], preferred_element_type=jnp.float32)
    for s in range(1, n_src):
        acc = acc + jnp.dot(a_ref[s], w_ref[0, s], preferred_element_type=jnp.float32)
    g_ref[0] = acc + b_ref[0]


def _input_projection(a, w, b, *, row_chunk=128):
    """a: (n_src, S, F), w: (2, n_src, F, 4H), b: (2, 1, 4H)  ->  G: (2, S, 4H)."""
    n_src, S, F = a.shape
    G4 = w.shape[-1]
    rc = _largest_divisor(S, row_chunk, 8)          # multiple of 8 sublanes (or full S)
    grid = (2, S // rc)
    return pl.pallas_call(
        _proj_kernel,
        out_shape=jax.ShapeDtypeStruct((2, S, G4), jnp.float32),
        grid_spec=pltpu.PrefetchScalarGridSpec(
            num_scalar_prefetch=0,
            grid=grid,
            in_specs=[
                pl.BlockSpec((n_src, rc, F), lambda d, r: (0, r, 0)),
                pl.BlockSpec((1, n_src, F, G4), lambda d, r: (d, 0, 0, 0)),
                pl.BlockSpec((1, 1, G4), lambda d, r: (d, 0, 0)),
            ],
            out_specs=pl.BlockSpec((1, rc, G4), lambda d, r: (d, r, 0)),
        ),
        compiler_params=pltpu.CompilerParams(
            dimension_semantics=("parallel", "parallel")),
        cost_estimate=pl.CostEstimate(
            flops=int(2 * 2 * n_src * S * F * G4),
            transcendentals=0,
            bytes_accessed=int(4 * (a.size + w.size + b.size + 2 * S * G4))),
    )(a, w, b)


# ---------------------------------------------------------------------------
# Kernel 2: recurrence (both directions via the grid, time chunked, h/c in scratch)
# ---------------------------------------------------------------------------
def _make_rec_kernel(tc, H, sum_output):
    """Recurrence over one time chunk of one direction.

    g_ref   : (1, Tc, B, 4H)  precomputed x@W_ih + b, in GLOBAL time order
    whh_ref : (1, H, 4H)      hidden->gates weights of this direction
    out_ref : (1, Tc, B, H)   hidden states                  (sum_output=False)
              (1, B, H)       running sum over time of h     (sum_output=True)
    h_scr, c_scr : (B, H)     carry, persistent across time chunks
    """
    def kernel(g_ref, whh_ref, out_ref, h_scr, c_scr):
        d = pl.program_id(0)            # 0 = forward, 1 = backward
        c = pl.program_id(1)            # time-chunk counter (bw chunks arrive reversed)

        @pl.when(c == 0)
        def _():
            h_scr[...] = jnp.zeros_like(h_scr)
            c_scr[...] = jnp.zeros_like(c_scr)
            if sum_output:
                out_ref[...] = jnp.zeros_like(out_ref)

        whh = whh_ref[0]                # hoisted: loaded once per chunk

        def cell(t, h, cc):
            gates = g_ref[0, t] + jnp.dot(h, whh, preferred_element_type=jnp.float32)
            i_g = jax.nn.sigmoid(gates[:, 0 * H:1 * H])
            f_g = jax.nn.sigmoid(gates[:, 1 * H:2 * H])
            g_g = jnp.tanh(gates[:, 2 * H:3 * H])
            o_g = jax.nn.sigmoid(gates[:, 3 * H:4 * H])
            cc = f_g * cc + i_g * g_g
            h = o_g * jnp.tanh(cc)
            return h, cc

        h0 = h_scr[...]
        c0 = c_scr[...]
        if sum_output:
            def step(s, carry):
                h, cc, acc = carry
                t = jnp.where(d == 0, s, tc - 1 - s)       # bw walks the chunk reversed
                h, cc = cell(t, h, cc)
                return h, cc, acc + h

            h_f, c_f, acc = lax.fori_loop(
                0, tc, step, (h0, c0, jnp.zeros_like(h0)), unroll=True)
            out_ref[0] = out_ref[0] + acc                  # output-resident accumulator
        else:
            def step(s, carry):
                h, cc = carry
                t = jnp.where(d == 0, s, tc - 1 - s)
                h, cc = cell(t, h, cc)
                out_ref[0, t] = h
                return h, cc

            h_f, c_f = lax.fori_loop(0, tc, step, (h0, c0), unroll=True)

        h_scr[...] = h_f
        c_scr[...] = c_f

    return kernel


def _recurrence(g, whh, tc, *, sum_output):
    """g: (2, T, B, 4H), whh: (2, H, 4H)  ->  (2, T, B, H) or (2, B, H)."""
    _, T, B, G4 = g.shape
    H = whh.shape[1]
    assert T % tc == 0
    nC = T // tc

    # chunk c of the backward direction maps to global time block nC-1-c
    def time_map(d, c):
        return (d, d * (nC - 1) + (1 - 2 * d) * c, 0, 0)

    if sum_output:
        out_shape = jax.ShapeDtypeStruct((2, B, H), jnp.float32)
        out_spec = pl.BlockSpec((1, B, H), lambda d, c: (d, 0, 0))
        out_bytes = 2 * B * H * 4
    else:
        out_shape = jax.ShapeDtypeStruct((2, T, B, H), jnp.float32)
        out_spec = pl.BlockSpec((1, tc, B, H), time_map)
        out_bytes = 2 * T * B * H * 4

    return pl.pallas_call(
        _make_rec_kernel(tc, H, sum_output),
        out_shape=out_shape,
        grid_spec=pltpu.PrefetchScalarGridSpec(
            num_scalar_prefetch=0,
            grid=(2, nC),
            in_specs=[
                pl.BlockSpec((1, tc, B, G4), time_map),
                pl.BlockSpec((1, H, G4), lambda d, c: (d, 0, 0)),
            ],
            out_specs=out_spec,
            scratch_shapes=[pltpu.VMEM((B, H), jnp.float32),   # h carry
                            pltpu.VMEM((B, H), jnp.float32)],  # c carry
        ),
        compiler_params=pltpu.CompilerParams(
            dimension_semantics=("parallel", "arbitrary")),
        cost_estimate=pl.CostEstimate(
            flops=int(2 * 2 * T * B * H * G4 + 2 * T * B * 10 * H),
            transcendentals=int(2 * T * B * 5 * H),
            bytes_accessed=int(4 * (g.size + whh.size) + out_bytes)),
    )(g, whh)


# ---------------------------------------------------------------------------
# Kernel 3: fused head  sigmoid(mean_t(output) @ W_fc + b_fc) from per-dir time sums
# ---------------------------------------------------------------------------
def _make_head_kernel(inv_t):
    def kernel(s_ref, w_ref, b_ref, o_ref):
        # s_ref: (2, B, H) per-direction time sums, w_ref: (2, 1, H), b_ref: (1, 1)
        z = (jnp.sum(s_ref[0] * w_ref[0], axis=-1, keepdims=True)
             + jnp.sum(s_ref[1] * w_ref[1], axis=-1, keepdims=True))
        o_ref[...] = jax.nn.sigmoid(z * inv_t + b_ref[...])
    return kernel


def _head(hsum, fc_wt, fc_b, seq_len):
    B = hsum.shape[1]
    return pl.pallas_call(
        _make_head_kernel(1.0 / seq_len),
        out_shape=jax.ShapeDtypeStruct((B, 1), jnp.float32),
        in_specs=[_VMEM_SPEC, _VMEM_SPEC, _VMEM_SPEC],
        out_specs=_VMEM_SPEC,
    )(hsum, fc_wt, fc_b)


# ---------------------------------------------------------------------------
# Forward pass (batch_first input, like the PyTorch module)
# ---------------------------------------------------------------------------
def lstm_forward(x, kp, *, time_chunk=16):
    """x: (B, T, input_dim).  Returns sigmoid probs of shape (B,)."""
    B, T, _ = x.shape
    H = kp["hidden_dim"]
    tc = _largest_divisor(T, time_chunk)
    n_layers = len(kp["layers"])

    xt = jnp.transpose(x, (1, 0, 2))                    # (T, B, Din) time-major
    a = xt.reshape(1, T * B, xt.shape[-1])              # single feature stream
    hsum = None
    for li, layer in enumerate(kp["layers"]):
        g = _input_projection(a, layer["wih"], layer["b"])      # (2, T*B, 4H)
        g = g.reshape(2, T, B, 4 * H)
        last = li == n_layers - 1
        out = _recurrence(g, layer["whh"], tc, sum_output=last)
        if last:
            hsum = out                                  # (2, B, H) time sums
        else:
            a = out.reshape(2, T * B, H)                # fw/bw streams, no concat copy
        # TODO(synk): dropout(0.2) between layers skipped (inference semantics).
    probs = _head(hsum, kp["fc_wt"], kp["fc_b"], T)     # (B, 1)
    return probs[:, 0]                                  # .squeeze()


# ---------------------------------------------------------------------------
# Parameters: raw PyTorch layout + re-layout for the kernels
# ---------------------------------------------------------------------------
def make_params(key, input_dim, hidden_dim, num_layers=3):
    k = 1.0 / float(hidden_dim) ** 0.5
    layers = []
    for layer in range(num_layers):
        din = input_dim if layer == 0 else 2 * hidden_dim
        dirs = {}
        for dname in ("fw", "bw"):
            key, k1, k2, k3, k4 = jax.random.split(key, 5)
            wih = jax.random.uniform(k1, (4 * hidden_dim, din), jnp.float32, -k, k)
            whh = jax.random.uniform(k2, (4 * hidden_dim, hidden_dim), jnp.float32, -k, k)
            bih = jax.random.uniform(k3, (4 * hidden_dim,), jnp.float32, -k, k)
            bhh = jax.random.uniform(k4, (4 * hidden_dim,), jnp.float32, -k, k)
            dirs[dname] = (wih, whh, bih, bhh)
        layers.append(dirs)
    key, k1, k2 = jax.random.split(key, 3)
    kf = 1.0 / float(2 * hidden_dim) ** 0.5
    fc_w = jax.random.uniform(k1, (1, 2 * hidden_dim), jnp.float32, -kf, kf)
    fc_b = jax.random.uniform(k2, (1,), jnp.float32, -kf, kf)
    return {"layers": layers, "fc_w": fc_w, "fc_b": fc_b, "hidden_dim": hidden_dim}


def to_kernel_params(raw):
    """Transpose / stack / bias-fold raw PyTorch-layout params for the kernels."""
    H = raw["hidden_dim"]
    layers_k = []
    for li, layer in enumerate(raw["layers"]):
        wih_s, whh_s, b_s = [], [], []
        for dname in ("fw", "bw"):
            wih, whh, bih, bhh = layer[dname]
            wih_t = wih.T                                          # (Din_l, 4H)
            if li == 0:
                w_src = wih_t[None]                                # (1, Din, 4H)
            else:                                                  # split fw/bw halves
                w_src = jnp.stack([wih_t[:H], wih_t[H:]], axis=0)  # (2, H, 4H)
            wih_s.append(w_src)
            whh_s.append(whh.T)                                    # (H, 4H)
            b_s.append((bih + bhh).reshape(1, 4 * H))              # bias folded once
        layers_k.append({
            "wih": jnp.stack(wih_s, axis=0),                       # (2, n_src, F, 4H)
            "whh": jnp.stack(whh_s, axis=0),                       # (2, H, 4H)
            "b":   jnp.stack(b_s, axis=0),                         # (2, 1, 4H)
        })
    fc_w = raw["fc_w"]                                             # (1, 2H)
    fc_wt = jnp.stack([fc_w[:, :H], fc_w[:, H:]], axis=0)          # (2, 1, H)
    return {"layers": layers_k, "fc_wt": fc_wt,
            "fc_b": raw["fc_b"].reshape(1, 1), "hidden_dim": H}


# ---------------------------------------------------------------------------
# Pure-JAX reference (same math, lax.scan) for correctness check
# ---------------------------------------------------------------------------
def _ref_layer_dir(x_tbd, wih, whh, bih, bhh):
    H = whh.shape[1]
    B = x_tbd.shape[1]
    wih_t, whh_t, b = wih.T, whh.T, (bih + bhh)[None, :]

    def step(carry, x_t):
        h, c = carry
        gates = x_t @ wih_t + h @ whh_t + b
        i = jax.nn.sigmoid(gates[:, 0 * H:1 * H])
        f = jax.nn.sigmoid(gates[:, 1 * H:2 * H])
        g = jnp.tanh(gates[:, 2 * H:3 * H])
        o = jax.nn.sigmoid(gates[:, 3 * H:4 * H])
        c = f * c + i * g
        h = o * jnp.tanh(c)
        return (h, c), h

    init = (jnp.zeros((B, H), jnp.float32), jnp.zeros((B, H), jnp.float32))
    _, hs = lax.scan(step, init, x_tbd)
    return hs


def ref_forward(x, raw):
    h = jnp.transpose(x, (1, 0, 2))
    for layer in raw["layers"]:
        fw = _ref_layer_dir(h, *layer["fw"])
        bw = _ref_layer_dir(h[::-1], *layer["bw"])[::-1]
        h = jnp.concatenate([fw, bw], axis=-1)
    m = jnp.mean(h, axis=0)                             # mean over time -> (B, 2H)
    return jax.nn.sigmoid(m @ raw["fc_w"].T + raw["fc_b"])[:, 0]


# ---------------------------------------------------------------------------
if __name__ == "__main__":
    # B multiple of 8 (full sublanes), T chunked into 2 time blocks of 16.
    B, T, INPUT_DIM, HIDDEN_DIM = 8, 32, 32, 16

    key = jax.random.PRNGKey(0)
    key, xk = jax.random.split(key)
    x = jax.random.normal(xk, (B, T, INPUT_DIM), jnp.float32)

    raw = make_params(key, INPUT_DIM, HIDDEN_DIM, num_layers=3)
    kp = to_kernel_params(raw)

    out = jax.block_until_ready(lstm_forward(x, kp, time_chunk=16))
    ref = jax.block_until_ready(ref_forward(x, raw))

    assert out.shape == (B,), f"unexpected output shape {out.shape}"
    # tolerance covers f32 accumulation-order differences (hoisted big projection matmul
    # vs. the per-step reference dots); any semantic bug would be orders larger.
    assert jnp.allclose(out, ref, atol=1e-4, rtol=1e-4), (out, ref)

    print("KERNEL_OK")
</pallas_src>

<mosaic_0001>
module attributes {stable_mosaic.version = 11 : i64} {
  func.func @_proj_kernel(%arg0: i32, %arg1: i32, %arg2: memref<1x128x32xf32, #tpu.memory_space<vmem>>, %arg3: memref<1x1x32x64xf32, #tpu.memory_space<vmem>>, %arg4: memref<1x1x64xf32, #tpu.memory_space<vmem>>, %arg5: memref<1x128x64xf32, #tpu.memory_space<vmem>>) attributes {dimension_semantics = [#tpu.dimension_semantics<parallel>, #tpu.dimension_semantics<parallel>], iteration_bounds = array<i64: 2, 2>, scalar_prefetch = 0 : i64, scratch_operands = 0 : i64, tpu.core_type = #tpu.core_type<tc>, window_params = [{transform_indices = @transform_0, window_bounds = array<i64: 1, 128, 32>}, {transform_indices = @transform_1, window_bounds = array<i64: 1, 1, 32, 64>}, {transform_indices = @transform_2, window_bounds = array<i64: 1, 1, 64>}, {transform_indices = @transform_3, window_bounds = array<i64: 1, 128, 64>}]} {
    %c0 = arith.constant 0 : index
    %c0_0 = arith.constant 0 : index
    %c0_1 = arith.constant 0 : index
    %0 = vector.load %arg2[%c0, %c0_0, %c0_1] : memref<1x128x32xf32, #tpu.memory_space<vmem>>, vector<1x128x32xf32>
    %1 = vector.shape_cast %0 : vector<1x128x32xf32> to vector<128x32xf32>
    %c0_2 = arith.constant 0 : index
    %c0_3 = arith.constant 0 : index
    %c0_4 = arith.constant 0 : index
    %c0_5 = arith.constant 0 : index
    %2 = vector.load %arg3[%c0_2, %c0_3, %c0_4, %c0_5] : memref<1x1x32x64xf32, #tpu.memory_space<vmem>>, vector<1x1x32x64xf32>
    %3 = vector.shape_cast %2 : vector<1x1x32x64xf32> to vector<32x64xf32>
    %cst = arith.constant dense<0.000000e+00> : vector<128x64xf32>
    %4 = tpu.matmul %1, %3, %cst {dimension_numbers = #tpu.dot_dimension_numbers<[1], [0], [0], [1], [0, 0, 1, 1], [], []>} : vector<128x32xf32>, vector<32x64xf32>, vector<128x64xf32> -> vector<128x64xf32>
    %c0_6 = arith.constant 0 : index
    %c0_7 = arith.constant 0 : index
    %c0_8 = arith.constant 0 : index
    %5 = vector.load %arg4[%c0_6, %c0_7, %c0_8] : memref<1x1x64xf32, #tpu.memory_space<vmem>>, vector<1x1x64xf32>
    %6 = vector.shape_cast %5 : vector<1x1x64xf32> to vector<1x64xf32>
    %7 = vector.broadcast %6 : vector<1x64xf32> to vector<128x64xf32>
    %8 = arith.addf %4, %7 : vector<128x64xf32>
    %c0_9 = arith.constant 0 : index
    %c0_10 = arith.constant 0 : index
    %c0_11 = arith.constant 0 : index
    %9 = vector.load %arg5[%c0_9, %c0_10, %c0_11] : memref<1x128x64xf32, #tpu.memory_space<vmem>>, vector<1x128x64xf32>
    %10 = vector.shape_cast %9 : vector<1x128x64xf32> to vector<128x64xf32>
    %11 = vector.shape_cast %8 : vector<128x64xf32> to vector<1x128x64xf32>
    tpu.vector_store %arg5[%c0_9, %c0_10, %c0_11], %11 {strides = array<i32>} : memref<1x128x64xf32, #tpu.memory_space<vmem>>, vector<1x128x64xf32>,
    return
  }
  func.func @transform_0(%arg0: i32, %arg1: i32) -> (i32, i32, i32) {
    %c0_i32 = arith.constant 0 : i32
    %c0_i32_0 = arith.constant 0 : i32
    %c0_i32_1 = arith.constant 0 : i32
    return %c0_i32, %arg1, %c0_i32_0 : i32, i32, i32
  }
  func.func @transform_1(%arg0: i32, %arg1: i32) -> (i32, i32, i32, i32) {
    %c0_i32 = arith.constant 0 : i32
    %c0_i32_0 = arith.constant 0 : i32
    %c0_i32_1 = arith.constant 0 : i32
    %c0_i32_2 = arith.constant 0 : i32
    return %arg0, %c0_i32, %c0_i32_0, %c0_i32_1 : i32, i32, i32, i32
  }
  func.func @transform_2(%arg0: i32, %arg1: i32) -> (i32, i32, i32) {
    %c0_i32 = arith.constant 0 : i32
    %c0_i32_0 = arith.constant 0 : i32
    %c0_i32_1 = arith.constant 0 : i32
    return %arg0, %c0_i32, %c0_i32_0 : i32, i32, i32
  }
  func.func @transform_3(%arg0: i32, %arg1: i32) -> (i32, i32, i32) {
    %c0_i32 = arith.constant 0 : i32
    %c0_i32_0 = arith.constant 0 : i32
    return %arg0, %arg1, %c0_i32 : i32, i32, i32
  }
}

</mosaic_0001>

<llo_original>
// kernel: tpu_custom_call.1
$region0: #{tpu_custom_call.1}
  #allocation0 [shape = 'u32[]', space=smem, size = 0x4, offset = 0x4, fixed_abs, tag = 'smem constant byte address 0x4 - core index']
  #allocation1 [shape = 'u32[144,128]{1,0:T(1,128)}', space=vmem, size = 0x12000, scoped, tag = 'internal scratch']
  %s0 = inlined_call_operand.vmem [shape: f32[1,256,32], index: 0, kind: input, shape index: {}]
  %s1 = inlined_call_operand.vmem [shape: f32[2,1,32,64], index: 1, kind: input, shape index: {}]
  %s2 = inlined_call_operand.vmem [shape: f32[2,1,64], index: 2, kind: input, shape index: {}]
  %s3 = inlined_call_operand.vmem [shape: f32[2,256,64], index: 3, kind: output, shape index: {}]
  %s4 = sld [smem:[#allocation0]]
  $region45: #{tpu_custom_call.1} parent=0
    _
  %s6 = ssub.s32 1, %s4
  %s7 = scalar_select 0, %s6, %s4
  loop: start=0, step=1, limit=6
  $region2: #{tpu_custom_call.1} parent=0 // loop_pre_header
    _
  $region3: #{tpu_custom_call.1} parent=0 // loop_header
    %s9 = sphi 0, %s13
    %p10 = scmp.ge.s32.totalorder %s9, 6
    %s16 = sphi 0, %s28
    %s17 = sphi 0, %s24
    %s18 = sphi 0, %s16
    %s19 = sphi 0, %s17
    %s20 = sphi 0, %s18
    %s21 = sphi 0, %s19
    %s31 = sphi 0, %s33
    %s34 = sphi 0, %s31
    %s35 = sphi 0, %s34
    %s51 = sphi 0, %s35
    %s57 = sphi 0, %s59
    %s60 = sphi 0, %s57
    %s61 = sphi 0, %s60
    %s77 = sphi 0, %s61
    %s83 = sphi 0, %s85
    %s86 = sphi 0, %s83
    %s87 = sphi 0, %s86
    %s103 = sphi 0, %s87
    %s111 = sphi 0, %s113
    %s114 = sphi 0, %s111
    %s115 = sphi 0, %s114
    %s131 = sphi 0, %s115
  $region4: #{tpu_custom_call.1} parent=0 // loop_header_branch
    %12 = sbr.rel (%p10) target = $region8
  $region5: #{tpu_custom_call.1} parent=0 // loop_body
    %s14 = ssub.s32 %s9, 1
    %s15 = ssub.s32 %s9, 2
    %s22 = sadd.s32 1, %s17
    %p23 = scmp.ge.s32.totalorder %s22, 2
    %s24 = scalar_select %p23, 0, %s22
    %s25 = sadd.s32 1, %s16
    %s26 = scalar_select %p23, %s25, %s16
    %p27 = scmp.ge.s32.totalorder %s26, 2
    %s28 = scalar_select %p27, 0, %s26
    %s29 = ssub.s32 %s17, %s24
    %p30 = scmp.eq.s32.totalorder %s29, 0
    %s32 = sadd.s32 %s31, 1
    %s33 = scalar_select %p30, %s31, %s32
    %p36 = pneg %p30
    %p37 = scmp.eq.s32.totalorder %s9, 3
    %p38 = por %p36, %p37
    %p39 = scmp.ne.s32.totalorder %s31, %s34
    %p40 = scmp.eq.s32.totalorder %s9, 0
    %p41 = por %p39, %p40
    %p42 = scmp.ne.s32.totalorder %s31, %s34
    %p43 = scmp.eq.s32.totalorder %s14, 3
    %p44 = por %p42, %p43
    %p45 = scmp.ne.s32.totalorder %s34, %s35
    %p46 = scmp.eq.s32.totalorder %s14, 0
    %p47 = por %p45, %p46
    %p48 = scmp.ne.s32.totalorder %s34, %s35
    %p49 = scmp.eq.s32.totalorder %s15, 3
    %p50 = por %p48, %p49
    %p52 = scmp.ne.s32.totalorder %s35, %s51
    %p53 = scmp.eq.s32.totalorder %s15, 0
    %p54 = por %p52, %p53
    %s55 = ssub.s32 %s16, %s28
    %p56 = scmp.eq.s32.totalorder %s55, 0
    %s58 = sadd.s32 %s57, 1
    %s59 = scalar_select %p56, %s57, %s58
    %p62 = pneg %p56
    %p63 = scmp.eq.s32.totalorder %s9, 3
    %p64 = por %p62, %p63
    %p65 = scmp.ne.s32.totalorder %s57, %s60
    %p66 = scmp.eq.s32.totalorder %s9, 0
    %p67 = por %p65, %p66
    %p68 = scmp.ne.s32.totalorder %s57, %s60
    %p69 = scmp.eq.s32.totalorder %s14, 3
    %p70 = por %p68, %p69
    %p71 = scmp.ne.s32.totalorder %s60, %s61
    %p72 = scmp.eq.s32.totalorder %s14, 0
    %p73 = por %p71, %p72
    %p74 = scmp.ne.s32.totalorder %s60, %s61
    %p75 = scmp.eq.s32.totalorder %s15, 3
    %p76 = por %p74, %p75
    %p78 = scmp.ne.s32.totalorder %s61, %s77
    %p79 = scmp.eq.s32.totalorder %s15, 0
    %p80 = por %p78, %p79
    %s81 = ssub.s32 %s16, %s28
    %p82 = scmp.eq.s32.totalorder %s81, 0
    %s84 = sadd.s32 %s83, 1
    %s85 = scalar_select %p82, %s83, %s84
    %p88 = pneg %p82
    %p89 = scmp.eq.s32.totalorder %s9, 3
    %p90 = por %p88, %p89
    %p91 = scmp.ne.s32.totalorder %s83, %s86
    %p92 = scmp.eq.s32.totalorder %s9, 0
    %p93 = por %p91, %p92
    %p94 = scmp.ne.s32.totalorder %s83, %s86
    %p95 = scmp.eq.s32.totalorder %s14, 3
    %p96 = por %p94, %p95
    %p97 = scmp.ne.s32.totalorder %s86, %s87
    %p98 = scmp.eq.s32.totalorder %s14, 0
    %p99 = por %p97, %p98
    %p100 = scmp.ne.s32.totalorder %s86, %s87
    %p101 = scmp.eq.s32.totalorder %s15, 3
    %p102 = por %p100, %p101
    %p104 = scmp.ne.s32.totalorder %s87, %s103
    %p105 = scmp.eq.s32.totalorder %s15, 0
    %p106 = por %p104, %p105
    %s107 = ssub.s32 %s16, %s28
    %s108 = ssub.s32 %s17, %s24
    %s109 = sor.u32 %s107, %s108
    %p110 = scmp.eq.s32.totalorder %s109, 0
    %s112 = sadd.s32 %s111, 1
    %s113 = scalar_select %p110, %s111, %s112
    %p116 = pneg %p110
    %p117 = scmp.eq.s32.totalorder %s9, 3
    %p118 = por %p116, %p117
    %p119 = scmp.ne.s32.totalorder %s111, %s114
    %p120 = scmp.eq.s32.totalorder %s9, 0
    %p121 = por %p119, %p120
    %p122 = scmp.ne.s32.totalorder %s111, %s114
    %p123 = scmp.eq.s32.totalorder %s14, 3
    %p124 = por %p122, %p123
    %p125 = scmp.ne.s32.totalorder %s114, %s115
    %p126 = scmp.eq.s32.totalorder %s14, 0
    %p127 = por %p125, %p126
    %p128 = scmp.ne.s32.totalorder %s114, %s115
    %p129 = scmp.eq.s32.totalorder %s15, 3
    %p130 = por %p128, %p129
    %p132 = scmp.ne.s32.totalorder %s115, %s131
    %p133 = scmp.eq.s32.totalorder %s15, 0
    %p134 = por %p132, %p133
    %p135 = scmp.le.s32.totalorder 1, %s9
    %p136 = scmp.lt.s32.totalorder %s9, 5
    %p137 = pnand %p135, %p136
    %p138 = pneg %p137
    // Predicated region
    $region9: #{tpu_custom_call.1} parent=5 // pred_check
      _
    $region10: #{tpu_custom_call.1} parent=5 // pred_check_branch
      %140 = sbr.rel (%p137) target = $region12
    $region11: #{tpu_custom_call.1} parent=5 // pred_region
      %s141 = ssub.s32 %s9, 1
    $region12: #{tpu_custom_call.1} parent=5 // pred_fallthru
      _
    %p142 = scmp.lt.s32.totalorder %s9, 4
    // Predicated region
    $region13: #{tpu_custom_call.1} parent=5 // pred_check
      %p143 = pneg %p142
    $region14: #{tpu_custom_call.1} parent=5 // pred_check_branch
      %145 = sbr.rel (%p143) target = $region16
    $region15: #{tpu_custom_call.1} parent=5 // pred_region
      // Predicated region
      $region17: #{tpu_custom_call.1} parent=15 // pred_check
        %p146 = pneg %p41
      $region18: #{tpu_custom_call.1} parent=15 // pred_check_branch
        %148 = sbr.rel (%p146) target = $region20
      $region19: #{tpu_custom_call.1} parent=15 // pred_region
        %s149 = smul.u32 16, %s17
        %p150 = scmp.lt.s32.totalorder %s149, 31
        %s151 = scalar_select %p150, %s149, 31
        %s152 = smul.addr %s151, 8
        %s153 = scalar_lea.vmem %s0, %s152
        %s154 = smul.u32 16, %s17
      $region20: #{tpu_custom_call.1} parent=15 // pred_fallthru
        _
      // Predicated region
      $region21: #{tpu_custom_call.1} parent=15 // pred_check
        %p155 = pneg %p67
      $region22: #{tpu_custom_call.1} parent=15 // pred_check_branch
        %157 = sbr.rel (%p155) target = $region24
      $region23: #{tpu_custom_call.1} parent=15 // pred_region
        %p158 = scmp.lt.s32.totalorder %s16, 1
        %s159 = scalar_select %p158, %s16, 1
        %s160 = smul.addr %s159, 4
        %s161 = smul.addr %s160, 8
        %s162 = scalar_lea.vmem %s1, %s161
      $region24: #{tpu_custom_call.1} parent=15 // pred_fallthru
        _
      // Predicated region
      $region25: #{tpu_custom_call.1} parent=15 // pred_check
        %p163 = pneg %p93
      $region26: #{tpu_custom_call.1} parent=15 // pred_check_branch
        %165 = sbr.rel (%p163) target = $region28
      $region27: #{tpu_custom_call.1} parent=15 // pred_region
        %p166 = scmp.lt.s32.totalorder %s16, 1
        %s167 = scalar_select %p166, %s16, 1
        %s168 = scalar_lea.vmem %s2, %s167
      $region28: #{tpu_custom_call.1} parent=15 // pred_fallthru
        _
    $region16: #{tpu_custom_call.1} parent=5 // pred_fallthru
      _
    %p169 = scmp.le.s32.totalorder 1, %s9
    %p170 = scmp.lt.s32.totalorder %s9, 5
    %p171 = pnand %p169, %p170
    %p172 = pneg %p171
    // Predicated region
    $region29: #{tpu_custom_call.1} parent=5 // pred_check
      _
    $region30: #{tpu_custom_call.1} parent=5 // pred_check_branch
      %174 = sbr.rel (%p171) target = $region32
    $region31: #{tpu_custom_call.1} parent=5 // pred_region
      %s175 = ssub.s32 %s9, 1
      %s176 = smul.u32 16, %s19
      %p177 = scmp.lt.s32.totalorder %s176, 31
      %s178 = scalar_select %p177, %s176, 31
      %s179 = smul.addr %s178, 8
      %s180 = scalar_lea.vmem %s0, %s179
      %p181 = pneg %p47
      %p182 = pneg %p44
      %p183 = scmp.lt.s32.totalorder %s18, 1
      %s184 = scalar_select %p183, %s18, 1
      %s185 = smul.addr %s184, 4
      %s186 = smul.addr %s185, 8
      %s187 = scalar_lea.vmem %s1, %s186
      %p188 = pneg %p73
      %p189 = pneg %p70
      %p190 = scmp.lt.s32.totalorder %s18, 1
      %s191 = scalar_select %p190, %s18, 1
      %s192 = scalar_lea.vmem %s2, %s191
      %p193 = pneg %p99
      %p194 = pneg %p96
      %p195 = pneg %p127
      %p196 = pneg %p124
      %s197 = smul.u32 16, %s19
      %p198 = scmp.lt.s32.totalorder %s18, 1
      %s199 = scalar_select %p198, %s18, 1
      %p200 = scmp.lt.s32.totalorder %s197, 31
      %s201 = scalar_select %p200, %s197, 31
      %s202 = smul.addr %s199, 32
      %s203 = sadd.s32 %s201, %s202
      %s204 = smul.addr %s203, 8
      %s205 = scalar_lea.vmem %s3, %s204
      %s206 = smul.u32 16, %s19
      %p207 = scmp.lt.s32.totalorder %s206, 31
      %s208 = scalar_select %p207, %s206, 31
      %s209 = smul.addr %s208, 8
      %s210 = scalar_lea.vmem %s0, %s209
      %s211 = smul.u32 16, %s19
      %p212 = scmp.lt.s32.totalorder %s18, 1
      %s213 = scalar_select %p212, %s18, 1
      %s214 = smul.addr %s213, 4
      %s215 = smul.addr %s214, 8
      %s216 = scalar_lea.vmem %s1, %s215
      %p217 = scmp.lt.s32.totalorder %s18, 1
      %s218 = scalar_select %p217, %s18, 1
      %s219 = scalar_lea.vmem %s2, %s218
      %s220 = smul.u32 16, %s19
      %p221 = scmp.lt.s32.totalorder %s18, 1
      %s222 = scalar_select %p221, %s18, 1
      %p223 = scmp.lt.s32.totalorder %s220, 31
      %s224 = scalar_select %p223, %s220, 31
      %s225 = smul.addr %s222, 32
      %s226 = sadd.s32 %s224, %s225
      %s227 = smul.addr %s226, 8
      %s228 = scalar_lea.vmem %s3, %s227
      %s229 = smul.u32 16, %s19
      %v230 = vld [vmem:[%s210] sm:$0xff]
      %v231 = vld [vmem:[%s210 + $0x8] sm:$0xff]
      %v232 = vld [vmem:[%s210 + $0x10] sm:$0xff]
      %v233 = vld [vmem:[%s210 + $0x18] sm:$0xff]
      %v234 = vld [vmem:[%s210 + $0x20] sm:$0xff]
      %v235 = vld [vmem:[%s210 + $0x28] sm:$0xff]
      %v236 = vld [vmem:[%s210 + $0x30] sm:$0xff]
      %v237 = vld [vmem:[%s210 + $0x38] sm:$0xff]
      %v238 = vld [vmem:[%s210 + $0x40] sm:$0xff]
      %v239 = vld [vmem:[%s210 + $0x48] sm:$0xff]
      %v240 = vld [vmem:[%s210 + $0x50] sm:$0xff]
      %v241 = vld [vmem:[%s210 + $0x58] sm:$0xff]
      %v242 = vld [vmem:[%s210 + $0x60] sm:$0xff]
      %v243 = vld [vmem:[%s210 + $0x68] sm:$0xff]
      %v244 = vld [vmem:[%s210 + $0x70] sm:$0xff]
      %v245 = vld [vmem:[%s210 + $0x78] sm:$0xff]
      %v246 = vld [vmem:[%s216] sm:$0xff]
      %v247 = vld [vmem:[%s216 + $0x8] sm:$0xff]
      %v248 = vld [vmem:[%s216 + $0x10] sm:$0xff]
      %v249 = vld [vmem:[%s216 + $0x18] sm:$0xff]
      %v250 = vld [vmem:[%s219] sm:$0x1]
      %v252 = vlaneseq
      %v253 = vshrl.u32 %v252, 7
      %v254 = vsub.s32 0, %v253
      %v255 = vrot.slane %v250, %v254
      %vm257 = vcmask 261120
      %v259 = vsel %vm257, %v230, 0
      %v262 = vsel %vm257, %v231, 0
      %v265 = vsel %vm257, %v232, 0
      %v268 = vsel %vm257, %v233, 0
      %v271 = vsel %vm257, %v234, 0
      %v274 = vsel %vm257, %v235, 0
      %v277 = vsel %vm257, %v236, 0
      %v280 = vsel %vm257, %v237, 0
      %v283 = vsel %vm257, %v238, 0
      %v286 = vsel %vm257, %v239, 0
      %v289 = vsel %vm257, %v240, 0
      %v292 = vsel %vm257, %v241, 0
      %v295 = vsel %vm257, %v242, 0
      %v298 = vsel %vm257, %v243, 0
      %v301 = vsel %vm257, %v244, 0
      %v304 = vsel %vm257, %v245, 0
      %306 = vmatprep.subr.mxu0 0.0
      %307 = vmatpush1.msra.mxu0 %v246
      %308 = vmatprep.subr.mxu0 0.0
      %309 = vmatpush1.msra.mxu0 %v247
      %310 = vmatprep.subr.mxu0 0.0
      %311 = vmatpush1.msra.mxu0 %v248
      %312 = vmatprep.subr.mxu0 0.0
      %313 = vmatpush1.msra.mxu0 %v249
      %314 = vmatprep.subr.mxu0 0.0
      %315 = vmatpush1.msra.mxu0 0.0
      %316 = vmatprep.subr.mxu0 0.0
      %317 = vmatpush1.msra.mxu0 0.0
      %318 = vmatprep.subr.mxu0 0.0
      %319 = vmatpush1.msra.mxu0 0.0
      %320 = vmatprep.subr.mxu0 0.0
      %321 = vmatpush1.msra.mxu0 0.0
      %322 = vmatprep.subr.mxu0 0.0
      %323 = vmatpush1.msra.mxu0 0.0
      %324 = vmatprep.subr.mxu0 0.0
      %325 = vmatpush1.msra.mxu0 0.0
      %326 = vmatprep.subr.mxu0 0.0
      %327 = vmatpush1.msra.mxu0 0.0
      %328 = vmatprep.subr.mxu0 0.0
      %329 = vmatpush1.msra.mxu0 0.0
      %330 = vmatprep.subr.mxu0 0.0
      %331 = vmatpush1.msra.mxu0 0.0
      %332 = vmatprep.subr.mxu0 0.0
      %333 = vmatpush1.msra.mxu0 0.0
      %334 = vmatprep.subr.mxu0 0.0
      %335 = vmatpush1.msra.mxu0 0.0
      %336 = vmatprep.subr.mxu0 0.0
      %337 = vmatpush1.msra.mxu0 0.0
      %338 = vmatprep.subr.mxu0 0.0
      %339 = vmatpush1.msra.mxu0 0.0
      %340 = vmatprep.subr.mxu0 0.0
      %341 = vmatpush1.msra.mxu0 0.0
      %342 = vmatprep.subr.mxu0 0.0
      %343 = vmatpush1.msra.mxu0 0.0
      %344 = vmatprep.subr.mxu0 0.0
      %345 = vmatpush1.msra.mxu0 0.0
      %346 = vmatprep.subr.mxu0 0.0
      %347 = vmatpush1.msra.mxu0 0.0
      %348 = vmatprep.subr.mxu0 0.0
      %349 = vmatpush1.msra.mxu0 0.0
      %350 = vmatprep.subr.mxu0 0.0
      %351 = vmatpush1.msra.mxu0 0.0
      %352 = vmatprep.subr.mxu0 0.0
      %353 = vmatpush1.msra.mxu0 0.0
      %354 = vmatprep.subr.mxu0 0.0
      %355 = vmatpush1.msra.mxu0 0.0
      %356 = vmatprep.subr.mxu0 0.0
      %357 = vmatpush1.msra.mxu0 0.0
      %358 = vmatprep.subr.mxu0 0.0
      %359 = vmatpush1.msra.mxu0 0.0
      %360 = vmatprep.subr.mxu0 0.0
      %361 = vmatpush1.msra.mxu0 0.0
      %362 = vmatprep.subr.mxu0 0.0
      %363 = vmatpush1.msra.mxu0 0.0
      %364 = vmatprep.subr.mxu0 0.0
      %365 = vmatpush1.msra.mxu0 0.0
      %366 = vmatprep.subr.mxu0 0.0
      %367 = vmatpush1.msra.mxu0 0.0
      %368 = vmatprep.subr.mxu0 0.0
      %369 = vmatpush1.msra.mxu0 0.0
      %370 = vmatprep.mubr.f32.mxu0 0.0
      %371 = vmatmul.mubr.f32.gmra.mrb[0].mxu0 %v259
      %v372 = vpop.f32.mrb[0].mxu0
      %v373 = vadd.f32 %v255, %v372
      %v374 = vpop.f32.mrb[0].mxu0
      %375 = vmatprep.mubr.f32.mxu0 0.0
      %376 = vmatmul.mubr.f32.gmra.mrb[0].mxu0 %v262
      %v377 = vpop.f32.mrb[0].mxu0
      %v378 = vadd.f32 %v255, %v377
      %v379 = vpop.f32.mrb[0].mxu0
      %380 = vmatprep.mubr.f32.mxu0 0.0
      %381 = vmatmul.mubr.f32.gmra.mrb[0].mxu0 %v265
      %v382 = vpop.f32.mrb[0].mxu0
      %v383 = vadd.f32 %v255, %v382
      %v384 = vpop.f32.mrb[0].mxu0
      %385 = vmatprep.mubr.f32.mxu0 0.0
      %386 = vmatmul.mubr.f32.gmra.mrb[0].mxu0 %v268
      %v387 = vpop.f32.mrb[0].mxu0
      %v388 = vadd.f32 %v255, %v387
      %v389 = vpop.f32.mrb[0].mxu0
      %390 = vmatprep.mubr.f32.mxu0 0.0
      %391 = vmatmul.mubr.f32.gmra.mrb[0].mxu0 %v271
      %v392 = vpop.f32.mrb[0].mxu0
      %v393 = vadd.f32 %v255, %v392
      %v394 = vpop.f32.mrb[0].mxu0
      %395 = vmatprep.mubr.f32.mxu0 0.0
      %396 = vmatmul.mubr.f32.gmra.mrb[0].mxu0 %v274
      %v397 = vpop.f32.mrb[0].mxu0
      %v398 = vadd.f32 %v255, %v397
      %v399 = vpop.f32.mrb[0].mxu0
      %400 = vmatprep.mubr.f32.mxu0 0.0
      %401 = vmatmul.mubr.f32.gmra.mrb[0].mxu0 %v277
      %v402 = vpop.f32.mrb[0].mxu0
      %v403 = vadd.f32 %v255, %v402
      %v404 = vpop.f32.mrb[0].mxu0
      %405 = vmatprep.mubr.f32.mxu0 0.0
      %406 = vmatmul.mubr.f32.gmra.mrb[0].mxu0 %v280
      %v407 = vpop.f32.mrb[0].mxu0
      %v408 = vadd.f32 %v255, %v407
      %v409 = vpop.f32.mrb[0].mxu0
      %410 = vmatprep.mubr.f32.mxu0 0.0
      %411 = vmatmul.mubr.f32.gmra.mrb[0].mxu0 %v283
      %v412 = vpop.f32.mrb[0].mxu0
      %v413 = vadd.f32 %v255, %v412
      %v414 = vpop.f32.mrb[0].mxu0
      %415 = vmatprep.mubr.f32.mxu0 0.0
      %416 = vmatmul.mubr.f32.gmra.mrb[0].mxu0 %v286
      %v417 = vpop.f32.mrb[0].mxu0
      %v418 = vadd.f32 %v255, %v417
      %v419 = vpop.f32.mrb[0].mxu0
      %420 = vmatprep.mubr.f32.mxu0 0.0
      %421 = vmatmul.mubr.f32.gmra.mrb[0].mxu0 %v289
      %v422 = vpop.f32.mrb[0].mxu0
      %v423 = vadd.f32 %v255, %v422
      %v424 = vpop.f32.mrb[0].mxu0
      %425 = vmatprep.mubr.f32.mxu0 0.0
      %426 = vmatmul.mubr.f32.gmra.mrb[0].mxu0 %v292
      %v427 = vpop.f32.mrb[0].mxu0
      %v428 = vadd.f32 %v255, %v427
      %v429 = vpop.f32.mrb[0].mxu0
      %430 = vmatprep.mubr.f32.mxu0 0.0
      %431 = vmatmul.mubr.f32.gmra.mrb[0].mxu0 %v295
      %v432 = vpop.f32.mrb[0].mxu0
      %v433 = vadd.f32 %v255, %v432
      %v434 = vpop.f32.mrb[0].mxu0
      %435 = vmatprep.mubr.f32.mxu0 0.0
      %436 = vmatmul.mubr.f32.gmra.mrb[0].mxu0 %v298
      %v437 = vpop.f32.mrb[0].mxu0
      %v438 = vadd.f32 %v255, %v437
      %v439 = vpop.f32.mrb[0].mxu0
      %440 = vmatprep.mubr.f32.mxu0 0.0
      %441 = vmatmul.mubr.f32.gmra.mrb[0].mxu0 %v301
      %v442 = vpop.f32.mrb[0].mxu0
      %v443 = vadd.f32 %v255, %v442
      %v444 = vpop.f32.mrb[0].mxu0
      %445 = vmatprep.mubr.f32.mxu0 0.0
      %446 = vmatmul.mubr.f32.gmra.mrb[0].mxu0 %v304
      %v447 = vpop.f32.mrb[0].mxu0
      %v448 = vadd.f32 %v255, %v447
      %v449 = vpop.f32.mrb[0].mxu0
      %450 = vdwg.mxu0
      %vm451 = vcmask 523264
      %452 = vst.msk [vmem:[%s228] sm:$0xff] %vm451, %v373
      %453 = vst.msk [vmem:[%s228 + $0x8] sm:$0xff] %vm451, %v378
      %454 = vst.msk [vmem:[%s228 + $0x10] sm:$0xff] %vm451, %v383
      %455 = vst.msk [vmem:[%s228 + $0x18] sm:$0xff] %vm451, %v388
      %456 = vst.msk [vmem:[%s228 + $0x20] sm:$0xff] %vm451, %v393
      %457 = vst.msk [vmem:[%s228 + $0x28] sm:$0xff] %vm451, %v398
      %458 = vst.msk [vmem:[%s228 + $0x30] sm:$0xff] %vm451, %v403
      %459 = vst.msk [vmem:[%s228 + $0x38] sm:$0xff] %vm451, %v408
      %460 = vst.msk [vmem:[%s228 + $0x40] sm:$0xff] %vm451, %v413
      %461 = vst.msk [vmem:[%s228 + $0x48] sm:$0xff] %vm451, %v418
      %462 = vst.msk [vmem:[%s228 + $0x50] sm:$0xff] %vm451, %v423
      %463 = vst.msk [vmem:[%s228 + $0x58] sm:$0xff] %vm451, %v428
      %464 = vst.msk [vmem:[%s228 + $0x60] sm:$0xff] %vm451, %v433
      %465 = vst.msk [vmem:[%s228 + $0x68] sm:$0xff] %vm451, %v438
      %466 = vst.msk [vmem:[%s228 + $0x70] sm:$0xff] %vm451, %v443
      %467 = vst.msk [vmem:[%s228 + $0x78] sm:$0xff] %vm451, %v448
      %s468 = smul.u32 16, %s19
      %p469 = scmp.lt.s32.totalorder %s18, 1
      %s470 = scalar_select %p469, %s18, 1
      %p471 = scmp.lt.s32.totalorder %s468, 31
      %s472 = scalar_select %p471, %s468, 31
      %s473 = smul.addr %s470, 32
      %s474 = sadd.s32 %s472, %s473
      %s475 = smul.addr %s474, 8
      %s476 = scalar_lea.vmem %s3, %s475
      // Predicated region
      $region33: #{tpu_custom_call.1} parent=31 // pred_check
        %p477 = pneg %p124
      $region34: #{tpu_custom_call.1} parent=31 // pred_check_branch
        %479 = sbr.rel (%p477) target = $region36
      $region35: #{tpu_custom_call.1} parent=31 // pred_region
        %s480 = smul.u32 16, %s19
      $region36: #{tpu_custom_call.1} parent=31 // pred_fallthru
        _
    $region32: #{tpu_custom_call.1} parent=5 // pred_fallthru
      _
    %p481 = scmp.le.s32.totalorder 2, %s9
    // Predicated region
    $region37: #{tpu_custom_call.1} parent=5 // pred_check
      %p482 = pneg %p481
    $region38: #{tpu_custom_call.1} parent=5 // pred_check_branch
      %484 = sbr.rel (%p482) target = $region40
    $region39: #{tpu_custom_call.1} parent=5 // pred_region
      %s485 = ssub.s32 %s9, 2
      // Predicated region
      $region41: #{tpu_custom_call.1} parent=39 // pred_check
        %p486 = pneg %p130
      $region42: #{tpu_custom_call.1} parent=39 // pred_check_branch
        %488 = sbr.rel (%p486) target = $region44
      $region43: #{tpu_custom_call.1} parent=39 // pred_region
        %s489 = smul.u32 16, %s21
        %p490 = scmp.lt.s32.totalorder %s20, 1
        %s491 = scalar_select %p490, %s20, 1
        %p492 = scmp.lt.s32.totalorder %s489, 31
        %s493 = scalar_select %p492, %s489, 31
        %s494 = smul.addr %s491, 32
        %s495 = sadd.s32 %s493, %s494
        %s496 = smul.addr %s495, 8
        %s497 = scalar_lea.vmem %s3, %s496
      $region44: #{tpu_custom_call.1} parent=39 // pred_fallthru
        _
    $region40: #{tpu_custom_call.1} parent=5 // pred_fallthru
      _
  $region6: #{tpu_custom_call.1} parent=0 // loop_footer
    %s13 = sadd.s32 1, %s9
  $region7: #{tpu_custom_call.1} parent=0 // loop_footer_branch
    %8 = sbr.rel target = $region3
  $region8: #{tpu_custom_call.1} parent=0 // loop_exit
    _

</llo_original>
